<compile_context>
chip_gen: v7x
topology: tpu7x:2x2x1
jax: 0.10.0
libtpu: 0.0.40
codegen_flags: <defaults>
</compile_context>

<pallas_src>
import jax
import jax.numpy as jnp
from jax.experimental import pallas as pl
from jax.experimental.pallas import tpu as pltpu


def _class_embed_dma_kernel(ids_ref, table_hbm, out_ref, copy_sem):
    # ids_ref:   (B,)            int32  SMEM (scalar prefetch)
    # table_hbm: (n_classes, D)         HBM (pl.ANY -- never copied wholesale)
    # out_ref:   (B, D)                 VMEM output block (DMA destination)
    # copy_sem:  ()                     single shared DMA semaphore
    batch = out_ref.shape[0]

    # Build every descriptor first: this reads all ids_ref[i] (SMEM) before any
    # .wait(), avoiding the sst->sld forwarding break a DMA wait would cause.
    # Note: if duplicate ids are common (e.g. CFG null class replicated across
    # the batch) the duplicate DMAs could be skipped under pl.when; not needed
    # here since B row DMAs already fully overlap.
    copies = [
        pltpu.make_async_copy(
            table_hbm.at[pl.ds(ids_ref[i], 1)],   # (1, D) row of the HBM table
            out_ref.at[pl.ds(i, 1)],              # (1, D) row of the output block
            copy_sem,                             # shared completion semaphore
        )
        for i in range(batch)
    ]
    # Issue all row DMAs back-to-back so they overlap, then drain the shared
    # semaphore (all copies are identical in size, so per-copy waits are exact).
    for cp in copies:
        cp.start()
    for cp in copies:
        cp.wait()


def _class_embed_gather_kernel(ids_ref, row_ref, out_ref):
    # ids_ref is only consumed by the index_maps; the body is a (1, D) tile copy.
    del ids_ref
    out_ref[...] = row_ref[...]


def class_embedder_forward(class_ids, embedding_table, *, unrolled_dma_max_batch=32):
    """Pallas equivalent of ClassEmbedder.forward.

    Args:
      class_ids: (B,) integer array of class labels (batch[key]).
      embedding_table: (n_classes, embed_dim) embedding weights.

    Returns:
      (B, 1, embed_dim) embeddings (matches the PyTorch output shape).
    """
    b = class_ids.shape[0]
    n_classes, embed_dim = embedding_table.shape
    assert n_classes < 2**31, "class ids must fit int32"

    # PyTorch nn.Embedding raises on out-of-range ids; here an out-of-range id
    # would be an out-of-bounds HBM DMA, so clamp in the wrapper (scalar-cheap).
    ids_i32 = jnp.clip(class_ids.astype(jnp.int32), 0, n_classes - 1)

    itemsize = jnp.dtype(embedding_table.dtype).itemsize
    cost = pl.CostEstimate(
        flops=0,
        transcendentals=0,
        bytes_accessed=2 * b * embed_dim * itemsize + b * 4,
    )

    if b <= unrolled_dma_max_batch:
        # Small batch: single grid step, B overlapped row DMAs straight into the
        # output block, one shared DMA semaphore.
        out = pl.pallas_call(
            _class_embed_dma_kernel,
            out_shape=jax.ShapeDtypeStruct((b, embed_dim), embedding_table.dtype),
            grid_spec=pltpu.PrefetchScalarGridSpec(
                num_scalar_prefetch=1,                           # ids -> SMEM
                grid=(1,),                                       # no per-row grid overhead
                in_specs=[pl.BlockSpec(memory_space=pl.ANY)],    # table stays in HBM
                out_specs=pl.BlockSpec((b, embed_dim), lambda i, ids: (0, 0)),
                scratch_shapes=[pltpu.SemaphoreType.DMA(())],    # single shared sem
            ),
            compiler_params=pltpu.CompilerParams(
                dimension_semantics=("arbitrary",),
            ),
            cost_estimate=cost,
        )(ids_i32, embedding_table)
    else:
        # Large batch: canonical scalar-prefetch gather.  grid=(B,) rows, the
        # table index_map picks row ids[i]; auto double-buffering hides the row
        # DMA and 'parallel' lets v7x split rows across both TensorCores.
        out = pl.pallas_call(
            _class_embed_gather_kernel,
            out_shape=jax.ShapeDtypeStruct((b, embed_dim), embedding_table.dtype),
            grid_spec=pltpu.PrefetchScalarGridSpec(
                num_scalar_prefetch=1,
                grid=(b,),
                in_specs=[pl.BlockSpec((1, embed_dim), lambda i, ids: (ids[i], 0))],
                out_specs=pl.BlockSpec((1, embed_dim), lambda i, ids: (i, 0)),
            ),
            compiler_params=pltpu.CompilerParams(
                dimension_semantics=("parallel",),
            ),
            cost_estimate=cost,
        )(ids_i32, embedding_table)

    # `[:, None]` from the PyTorch forward.  Kept outside the kernel: inserting a
    # unit axis on a row-major (B, D) array is a metadata-only reshape, and the
    # kernel output stays lane-dense (last dim = embed_dim = 128) with the
    # simplest possible block layout.
    return out.reshape(b, 1, embed_dim)


if __name__ == "__main__":
    # Module hyperparameters (nn.Embedding(n_classes, embed_dim)).
    n_classes = 1000
    embed_dim = 128
    batch_size = 4

    key = jax.random.PRNGKey(0)
    k_table, k_ids, k_ids_big = jax.random.split(key, 3)

    # nn.Embedding default init: weights ~ N(0, 1). Deterministic synthetic init.
    embedding_table = jax.random.normal(
        k_table, (n_classes, embed_dim), dtype=jnp.float32
    )

    # Small batch -> unrolled multi-DMA path (the ClassEmbedder-typical case).
    class_ids = jax.random.randint(
        k_ids, (batch_size,), minval=0, maxval=n_classes, dtype=jnp.int32
    )
    batch = {"class": class_ids}
    out = jax.block_until_ready(class_embedder_forward(batch["class"], embedding_table))
    ref = jnp.take(embedding_table, class_ids, axis=0)[:, None, :]
    assert out.shape == (batch_size, 1, embed_dim), out.shape
    assert jnp.array_equal(out, ref), "small-batch path mismatch vs reference gather"

    # Larger batch -> auto-pipelined scalar-prefetch gather path.
    big_batch = 64
    class_ids_big = jax.random.randint(
        k_ids_big, (big_batch,), minval=0, maxval=n_classes, dtype=jnp.int32
    )
    out_big = jax.block_until_ready(
        class_embedder_forward(class_ids_big, embedding_table)
    )
    ref_big = jnp.take(embedding_table, class_ids_big, axis=0)[:, None, :]
    assert out_big.shape == (big_batch, 1, embed_dim), out_big.shape
    assert jnp.array_equal(out_big, ref_big), "large-batch path mismatch vs reference gather"

    print("KERNEL_OK")
</pallas_src>

<mosaic_0001>
module attributes {stable_mosaic.version = 11 : i64} {
  func.func @_class_embed_dma_kernel(%arg0: i32, %arg1: memref<4xi32, #tpu.memory_space<smem>>, %arg2: memref<1000x128xf32, #tpu.memory_space<any>>, %arg3: memref<4x128xf32, #tpu.memory_space<vmem>>, %arg4: memref<!tpu.dma_semaphore, #tpu.memory_space<semaphore_mem>>) attributes {dimension_semantics = [#tpu.dimension_semantics<arbitrary>], iteration_bounds = array<i64: 1>, scalar_prefetch = 1 : i64, scratch_operands = 1 : i64, tpu.core_type = #tpu.core_type<tc>, window_params = [{}, {pipeline_mode = #tpu.pipeline_mode<synchronous>, transform_indices = @transform_1, window_bounds = array<i64: 4, 128>}]} {
    %c0 = arith.constant 0 : index
    %0 = memref.load %arg1[%c0] : memref<4xi32, #tpu.memory_space<smem>>
    %c1 = arith.constant 1 : index
    %1 = memref.load %arg1[%c1] : memref<4xi32, #tpu.memory_space<smem>>
    %c2 = arith.constant 2 : index
    %2 = memref.load %arg1[%c2] : memref<4xi32, #tpu.memory_space<smem>>
    %c3 = arith.constant 3 : index
    %3 = memref.load %arg1[%c3] : memref<4xi32, #tpu.memory_space<smem>>
    %c0_i32 = arith.constant 0 : i32
    %4 = tpu.memref_slice %arg2[%0, %c0_i32] : memref<1000x128xf32, #tpu.memory_space<any>> -> memref<1x128xf32, #tpu.memory_space<any>>
    %c0_i32_0 = arith.constant 0 : i32
    %c0_i32_1 = arith.constant 0 : i32
    %5 = tpu.memref_slice %arg3[%c0_i32_0, %c0_i32_1] : memref<4x128xf32, #tpu.memory_space<vmem>> -> memref<1x128xf32, #tpu.memory_space<vmem>>
    tpu.enqueue_dma source(%4 : memref<1x128xf32, #tpu.memory_space<any>>) target(%5 : memref<1x128xf32, #tpu.memory_space<vmem>>) target_semaphore(%arg4 : memref<!tpu.dma_semaphore, #tpu.memory_space<semaphore_mem>>)
    %c0_i32_2 = arith.constant 0 : i32
    %6 = tpu.memref_slice %arg2[%1, %c0_i32_2] : memref<1000x128xf32, #tpu.memory_space<any>> -> memref<1x128xf32, #tpu.memory_space<any>>
    %c1_i32 = arith.constant 1 : i32
    %c0_i32_3 = arith.constant 0 : i32
    %7 = tpu.memref_slice %arg3[%c1_i32, %c0_i32_3] : memref<4x128xf32, #tpu.memory_space<vmem>> -> memref<1x128xf32, #tpu.memory_space<vmem>>
    tpu.enqueue_dma source(%6 : memref<1x128xf32, #tpu.memory_space<any>>) target(%7 : memref<1x128xf32, #tpu.memory_space<vmem>>) target_semaphore(%arg4 : memref<!tpu.dma_semaphore, #tpu.memory_space<semaphore_mem>>)
    %c0_i32_4 = arith.constant 0 : i32
    %8 = tpu.memref_slice %arg2[%2, %c0_i32_4] : memref<1000x128xf32, #tpu.memory_space<any>> -> memref<1x128xf32, #tpu.memory_space<any>>
    %c2_i32 = arith.constant 2 : i32
    %c0_i32_5 = arith.constant 0 : i32
    %9 = tpu.memref_slice %arg3[%c2_i32, %c0_i32_5] : memref<4x128xf32, #tpu.memory_space<vmem>> -> memref<1x128xf32, #tpu.memory_space<vmem>>
    tpu.enqueue_dma source(%8 : memref<1x128xf32, #tpu.memory_space<any>>) target(%9 : memref<1x128xf32, #tpu.memory_space<vmem>>) target_semaphore(%arg4 : memref<!tpu.dma_semaphore, #tpu.memory_space<semaphore_mem>>)
    %c0_i32_6 = arith.constant 0 : i32
    %10 = tpu.memref_slice %arg2[%3, %c0_i32_6] : memref<1000x128xf32, #tpu.memory_space<any>> -> memref<1x128xf32, #tpu.memory_space<any>>
    %c3_i32 = arith.constant 3 : i32
    %c0_i32_7 = arith.constant 0 : i32
    %11 = tpu.memref_slice %arg3[%c3_i32, %c0_i32_7] : memref<4x128xf32, #tpu.memory_space<vmem>> -> memref<1x128xf32, #tpu.memory_space<vmem>>
    tpu.enqueue_dma source(%10 : memref<1x128xf32, #tpu.memory_space<any>>) target(%11 : memref<1x128xf32, #tpu.memory_space<vmem>>) target_semaphore(%arg4 : memref<!tpu.dma_semaphore, #tpu.memory_space<semaphore_mem>>)
    %c0_i32_8 = arith.constant 0 : i32
    %12 = tpu.memref_slice %arg2[%0, %c0_i32_8] : memref<1000x128xf32, #tpu.memory_space<any>> -> memref<1x128xf32, #tpu.memory_space<any>>
    %c0_i32_9 = arith.constant 0 : i32
    %c0_i32_10 = arith.constant 0 : i32
    %13 = tpu.memref_slice %arg3[%c0_i32_9, %c0_i32_10] : memref<4x128xf32, #tpu.memory_space<vmem>> -> memref<1x128xf32, #tpu.memory_space<vmem>>
    tpu.wait_dma2 semaphore(%arg4 : memref<!tpu.dma_semaphore, #tpu.memory_space<semaphore_mem>>) src(%12 : memref<1x128xf32, #tpu.memory_space<any>>) dst(%13 : memref<1x128xf32, #tpu.memory_space<vmem>>)
    %c0_i32_11 = arith.constant 0 : i32
    %14 = tpu.memref_slice %arg2[%1, %c0_i32_11] : memref<1000x128xf32, #tpu.memory_space<any>> -> memref<1x128xf32, #tpu.memory_space<any>>
    %c1_i32_12 = arith.constant 1 : i32
    %c0_i32_13 = arith.constant 0 : i32
    %15 = tpu.memref_slice %arg3[%c1_i32_12, %c0_i32_13] : memref<4x128xf32, #tpu.memory_space<vmem>> -> memref<1x128xf32, #tpu.memory_space<vmem>>
    tpu.wait_dma2 semaphore(%arg4 : memref<!tpu.dma_semaphore, #tpu.memory_space<semaphore_mem>>) src(%14 : memref<1x128xf32, #tpu.memory_space<any>>) dst(%15 : memref<1x128xf32, #tpu.memory_space<vmem>>)
    %c0_i32_14 = arith.constant 0 : i32
    %16 = tpu.memref_slice %arg2[%2, %c0_i32_14] : memref<1000x128xf32, #tpu.memory_space<any>> -> memref<1x128xf32, #tpu.memory_space<any>>
    %c2_i32_15 = arith.constant 2 : i32
    %c0_i32_16 = arith.constant 0 : i32
    %17 = tpu.memref_slice %arg3[%c2_i32_15, %c0_i32_16] : memref<4x128xf32, #tpu.memory_space<vmem>> -> memref<1x128xf32, #tpu.memory_space<vmem>>
    tpu.wait_dma2 semaphore(%arg4 : memref<!tpu.dma_semaphore, #tpu.memory_space<semaphore_mem>>) src(%16 : memref<1x128xf32, #tpu.memory_space<any>>) dst(%17 : memref<1x128xf32, #tpu.memory_space<vmem>>)
    %c0_i32_17 = arith.constant 0 : i32
    %18 = tpu.memref_slice %arg2[%3, %c0_i32_17] : memref<1000x128xf32, #tpu.memory_space<any>> -> memref<1x128xf32, #tpu.memory_space<any>>
    %c3_i32_18 = arith.constant 3 : i32
    %c0_i32_19 = arith.constant 0 : i32
    %19 = tpu.memref_slice %arg3[%c3_i32_18, %c0_i32_19] : memref<4x128xf32, #tpu.memory_space<vmem>> -> memref<1x128xf32, #tpu.memory_space<vmem>>
    tpu.wait_dma2 semaphore(%arg4 : memref<!tpu.dma_semaphore, #tpu.memory_space<semaphore_mem>>) src(%18 : memref<1x128xf32, #tpu.memory_space<any>>) dst(%19 : memref<1x128xf32, #tpu.memory_space<vmem>>)
    return
  }
  func.func @transform_1(%arg0: i32, %arg1: memref<4xi32, #tpu.memory_space<smem>>) -> (i32, i32) {
    %c0_i32 = arith.constant 0 : i32
    %c0_i32_0 = arith.constant 0 : i32
    %c0_i32_1 = arith.constant 0 : i32
    return %c0_i32, %c0_i32_0 : i32, i32
  }
}

</mosaic_0001>

<llo_original>
// kernel: tpu_custom_call.1
$region0: #{tpu_custom_call.1}
  #allocation0 [shape = 'u32[]', space=smem, size = 0x4, offset = 0x4, fixed_abs, tag = 'smem constant byte address 0x4 - core index']
  #allocation1 [shape = 'u32[144,128]{1,0:T(1,128)}', space=vmem, size = 0x12000, scoped, tag = 'internal scratch']
  #allocation2 [shape = 's32[1]{0}', space=sflag, size = 0x4, scoped, tag = 'scratch operand']
  #allocation3 [shape = 's32[1]{0}', space=sflag, size = 0x4, scoped, tag = 'scoped memory for tpu_custom_call.1']
  #allocation4 [shape = 'u8[512]{0}', space=smem, size = 0x200, scoped, tag = 'prefetched SMEM operand 0']
  #allocation7 [shape = 's32[]', space=sflag, size = 0x4, offset = 0, fixed_abs, tag = 'sflag constant byte address 0x0 - dummy sync flag']
  #allocation8 [shape = 's32[]', space=sflag, size = 0x4, offset = 0, fixed_abs, tag = 'sflag constant byte address 0x0 - dummy sync flag']
  #allocation9 [shape = 'u32[]', space=smem, size = 0x4, offset = 0x44, fixed_abs, tag = 'smem constant byte address 0x44 - assertion arg 0']
  #allocation10 [shape = 'u32[]', space=smem, size = 0x4, offset = 0x48, fixed_abs, tag = 'smem constant byte address 0x48 - assertion arg 1']
  #allocation11 [shape = 's32[]', space=sflag, size = 0x4, offset = 0, fixed_abs, tag = 'sflag constant byte address 0x0 - dummy sync flag']
  #allocation12 [shape = 's32[]', space=sflag, size = 0x4, offset = 0, fixed_abs, tag = 'sflag constant byte address 0x0 - dummy sync flag']
  #allocation13 [shape = 's32[]', space=sflag, size = 0x4, offset = 0, fixed_abs, tag = 'sflag constant byte address 0x0 - dummy sync flag']
  #allocation14 [shape = 's32[]', space=sflag, size = 0x4, offset = 0, fixed_abs, tag = 'sflag constant byte address 0x0 - dummy sync flag']
  #allocation15 [shape = 's32[]', space=sflag, size = 0x4, offset = 0, fixed_abs, tag = 'sflag constant byte address 0x0 - dummy sync flag']
  #allocation16 [shape = 's32[]', space=sflag, size = 0x4, offset = 0, fixed_abs, tag = 'sflag constant byte address 0x0 - dummy sync flag']
  %s0 = inlined_call_operand.hbm [shape: s32[4], index: 0, kind: input, shape index: {}]
  %s1 = inlined_call_operand.hbm [shape: f32[1000,128], index: 1, kind: input, shape index: {}]
  %s2 = inlined_call_operand.hbm [shape: f32[4,128], index: 2, kind: output, shape index: {}]
  %s3 = sld [smem:[#allocation0]]
  $region26: #{tpu_custom_call.1} parent=0
    _
  %s5 = ssub.s32 1, %s3
  %s6 = scalar_select 0, %s5, %s3
  %8 = dma.hbm_to_smem %s0, 16, [#allocation4], [#allocation3]
  %9 = dma.done [#allocation3], 16
  %10 = sfence
  $region1: #{tpu_custom_call.1} parent=0
    #allocation5 [shape = 'u8[2048]{0}', space=vmem, size = 0x800, scoped, tag = 'output window, operand 0, single buffered']
    #allocation6 [shape = 's32[1]{0}', space=sflag, size = 0x4, scoped, tag = 'scoped memory for tpu_custom_call.1']
    %11 = vsyncpa [#allocation6], 0
    %s12 = sld [smem:[#allocation4]]
    %s13 = sld [smem:[#allocation4 + $0x1]]
    %s14 = sld [smem:[#allocation4 + $0x2]]
    %s15 = sld [smem:[#allocation4 + $0x3]]
    %s16 = smul.addr %s12, 16
    %s17 = scalar_lea.hbm %s1, %s16
    // Predicated region
    $region2: #{tpu_custom_call.1} parent=1 // pred_check
      _
    $region3: #{tpu_custom_call.1} parent=1 // pred_check_branch
      %19 = sbr.rel target = $region5
    $region4: #{tpu_custom_call.1} parent=1 // pred_region
      %20 = sst [smem:[#allocation9]] [#allocation8]
      %21 = sst [smem:[#allocation10]] [#allocation7]
    $region5: #{tpu_custom_call.1} parent=1 // pred_fallthru
      _
    %23 = shalt.err (0)
    %s25 = sshll.u32 [#allocation5], 4
    %s26 = int_to_ptr.vmem [resolvable:$true] %s25
    %28 = dma.hbm_to_vmem [thread:$0]  %s17, 16, %s26, [#allocation2]
    %s29 = smul.addr %s13, 16
    %s30 = scalar_lea.hbm %s1, %s29
    %s31 = scalar_lea.vmem [#allocation5], 1
    // Predicated region
    $region6: #{tpu_custom_call.1} parent=1 // pred_check
      _
    $region7: #{tpu_custom_call.1} parent=1 // pred_check_branch
      %33 = sbr.rel target = $region9
    $region8: #{tpu_custom_call.1} parent=1 // pred_region
      %34 = sst [smem:[#allocation9]] [#allocation12]
      %35 = sst [smem:[#allocation10]] [#allocation11]
    $region9: #{tpu_custom_call.1} parent=1 // pred_fallthru
      _
    %37 = shalt.err (0)
    %s39 = sshll.u32 %s31, 4
    %s40 = int_to_ptr.vmem [resolvable:$true] %s39
    %42 = dma.hbm_to_vmem [thread:$0]  %s30, 16, %s40, [#allocation2]
    %s43 = smul.addr %s14, 16
    %s44 = scalar_lea.hbm %s1, %s43
    %s45 = scalar_lea.vmem [#allocation5], 2
    // Predicated region
    $region10: #{tpu_custom_call.1} parent=1 // pred_check
      _
    $region11: #{tpu_custom_call.1} parent=1 // pred_check_branch
      %47 = sbr.rel target = $region13
    $region12: #{tpu_custom_call.1} parent=1 // pred_region
      %48 = sst [smem:[#allocation9]] [#allocation14]
      %49 = sst [smem:[#allocation10]] [#allocation13]
    $region13: #{tpu_custom_call.1} parent=1 // pred_fallthru
      _
    %51 = shalt.err (0)
    %s53 = sshll.u32 %s45, 4
    %s54 = int_to_ptr.vmem [resolvable:$true] %s53
    %56 = dma.hbm_to_vmem [thread:$0]  %s44, 16, %s54, [#allocation2]
    %s57 = smul.addr %s15, 16
    %s58 = scalar_lea.hbm %s1, %s57
    %s59 = scalar_lea.vmem [#allocation5], 3
    // Predicated region
    $region14: #{tpu_custom_call.1} parent=1 // pred_check
      _
    $region15: #{tpu_custom_call.1} parent=1 // pred_check_branch
      %61 = sbr.rel target = $region17
    $region16: #{tpu_custom_call.1} parent=1 // pred_region
      %62 = sst [smem:[#allocation9]] [#allocation16]
      %63 = sst [smem:[#allocation10]] [#allocation15]
    $region17: #{tpu_custom_call.1} parent=1 // pred_fallthru
      _
    %65 = shalt.err (0)
    %s67 = sshll.u32 %s59, 4
    %s68 = int_to_ptr.vmem [resolvable:$true] %s67
    %70 = dma.hbm_to_vmem [thread:$0]  %s58, 16, %s68, [#allocation2]
    %s71 = smul.u32 1, 1
    %s72 = sshll.u32 %s71, 4
    %73 = dma.done [#allocation2], %s72
    %s74 = sshll.u32 %s71, 4
    %75 = dma.done [#allocation2], %s74
    %s76 = sshll.u32 %s71, 4
    %77 = dma.done [#allocation2], %s76
    %s78 = sshll.u32 %s71, 4
    %79 = dma.done [#allocation2], %s78
    // Predicated region
    $region18: #{tpu_custom_call.1} parent=1 // pred_check
      _
    $region19: #{tpu_custom_call.1} parent=1 // pred_check_branch
      %81 = sbr.rel (0) target = $region21
    $region20: #{tpu_custom_call.1} parent=1 // pred_region
      %s83 = ssub.s32 64, 64
      %84 = vsyncadd [#allocation6], %s83
      %s86 = sshll.u32 [#allocation5], 4
      %s87 = int_to_ptr.vmem [resolvable:$true] %s86
      %89 = dma.vmem_to_hbm [thread:$0]  %s87, 64, %s2, [#allocation6]
    $region21: #{tpu_custom_call.1} parent=1 // pred_fallthru
      _
    // Predicated region
    $region22: #{tpu_custom_call.1} parent=1 // pred_check
      _
    $region23: #{tpu_custom_call.1} parent=1 // pred_check_branch
      %91 = sbr.rel (0) target = $region25
    $region24: #{tpu_custom_call.1} parent=1 // pred_region
      %92 = dma.done [#allocation6], 64
    $region25: #{tpu_custom_call.1} parent=1 // pred_fallthru
      _
    %93 = vsyncpa [#allocation6], 1
  %94 = vsyncmov [#allocation2]
  %s95 = vpop.sfrf %94
  %p96 = scmp.eq.s32.totalorder %s95, 0
  %p97 = pneg %p96
  %99 = shalt.err (%p97)

</llo_original>
